<compile_context>
chip_gen: v7x
topology: tpu7x:2x2x1
jax: 0.10.0
libtpu: 0.0.40
codegen_flags: <defaults>
</compile_context>

<pallas_src>
import jax
import jax.numpy as jnp
from jax.experimental import pallas as pl
from jax.experimental.pallas import tpu as pltpu


def _sap_kernel(x_ref, w_ref, out_ref):
    # x_ref  : (BN, T, H) VMEM block of batch_rep
    # w_ref  : (1, H)     fused weight vector (W2 @ W1), VMEM-resident
    # out_ref: (BN, H)    output block
    x = x_ref[...]                                        # (BN, T, H) f32
    w = w_ref[...]                                        # (1, H)

    # Fused attention logits (bias dropped: constant over T cancels in softmax).
    #   logits[b, t] = sum_h x[b, t, h] * w_eff[h]
    # Lane (H) reduction -> lane-dense (BN, T) result.
    logits = jnp.sum(x * w[None, :, :], axis=-1)          # (BN, T)

    # Numerically stable, un-normalized softmax weights over the sequence axis.
    m = jnp.max(logits, axis=-1, keepdims=True)           # (BN, 1)
    e = jnp.exp(logits - m)                               # (BN, T)  (EUP)
    denom = jnp.sum(e, axis=-1, keepdims=True)            # (BN, 1)

    # Weighted sum over T with deferred normalization:
    #   pooled[b, h] = (sum_t e[b, t] * x[b, t, h]) / denom[b]
    num = jnp.sum(x * e[:, :, None], axis=1)              # (BN, H) sublane reduce
    out_ref[...] = num * pl.reciprocal(denom, approx=False)  # exact, one per row


def _pick_block_n(N, T, H, target_bytes=4 * 1024 * 1024, cap_hint=None):
    """Batch tile size: ~2-4 MiB per input block (Pallas double-buffers it),
    must divide N; prefer multiples of 8 for sublane-aligned output slabs.
    Conservative enough for v7x's smaller (64 MiB) VMEM."""
    per_row = T * H * 4  # bytes per batch element (f32)
    cap = max(1, target_bytes // max(per_row, 1))
    if cap_hint is not None:
        cap = min(cap, max(1, cap_hint))
    if N <= cap:
        return N
    divisors = [d for d in range(1, cap + 1) if N % d == 0]
    aligned = [d for d in divisors if d % 8 == 0]
    return max(aligned) if aligned else max(divisors)


def self_attention_pooling(batch_rep, w1, b1, w2, b2, *, block_n=None):
    """batch_rep: (N, T, H) float32 -> (N, H) float32.

    Weights follow torch.nn.Linear convention: y = x @ W.T + b,
    W1:(H,H), b1:(H,), W2:(1,H), b2:(1,).
    b1/b2 contribute only a per-row constant to the pre-softmax logits and
    therefore cancel exactly in the softmax; they are intentionally unused.
    """
    N, T, H = batch_rep.shape
    batch_rep = batch_rep.astype(jnp.float32)
    del b1, b2  # shift-invariance of softmax over T -> biases have no effect

    # Algebraic fusion of the two linear layers (no activation between):
    #   softmax_T((x @ W1.T + b1) @ W2.T + b2) == softmax_T(x @ (W2 @ W1).T)
    w_eff = (w2.astype(jnp.float32) @ w1.astype(jnp.float32)).reshape(1, H)  # (1, H)

    bn = _pick_block_n(N, T, H, cap_hint=block_n)
    grid = (N // bn,)

    return pl.pallas_call(
        _sap_kernel,
        out_shape=jax.ShapeDtypeStruct((N, H), jnp.float32),
        grid_spec=pltpu.PrefetchScalarGridSpec(
            num_scalar_prefetch=0,
            grid=grid,
            in_specs=[
                # batch_rep tile: (BN, T, H); last two dims are full extents.
                pl.BlockSpec((bn, T, H), lambda i: (i, 0, 0)),
                # fused weight vector, VMEM-resident (constant index map).
                pl.BlockSpec((1, H), lambda i: (0, 0)),
            ],
            out_specs=pl.BlockSpec((bn, H), lambda i: (i, 0)),
        ),
        compiler_params=pltpu.CompilerParams(
            # Batch axis is fully independent -> shard grid steps across cores.
            dimension_semantics=("parallel",),
        ),
    )(batch_rep, w_eff)


def _reference(batch_rep, w1, b1, w2, b2):
    h = batch_rep @ w1.T + b1                            # (N, T, H)
    logits = (h @ w2.T + b2).squeeze(-1)                 # (N, T)
    att = jax.nn.softmax(logits, axis=-1)[..., None]     # (N, T, 1)
    return jnp.sum(batch_rep * att, axis=1)              # (N, H)


if __name__ == "__main__":
    key = jax.random.PRNGKey(0)
    kx, kw1, kb1, kw2, kb2, kx2 = jax.random.split(key, 6)

    # Small shapes consistent with the module: batch=2, seq=8, hidden=32.
    N, T, H = 2, 8, 32
    x = jax.random.normal(kx, (N, T, H), dtype=jnp.float32)
    w1 = jax.random.normal(kw1, (H, H), dtype=jnp.float32) * 0.1
    b1 = jax.random.normal(kb1, (H,), dtype=jnp.float32) * 0.1
    w2 = jax.random.normal(kw2, (1, H), dtype=jnp.float32) * 0.1
    b2 = jax.random.normal(kb2, (1,), dtype=jnp.float32) * 0.1

    out = jax.block_until_ready(self_attention_pooling(x, w1, b1, w2, b2))
    ref = _reference(x, w1, b1, w2, b2)
    assert out.shape == (N, H)
    assert jnp.allclose(out, ref, atol=1e-5, rtol=1e-5), "mismatch vs reference (single tile)"

    # Also exercise the multi-step batched grid (BN=8 -> 2 grid steps).
    N2 = 16
    x2 = jax.random.normal(kx2, (N2, T, H), dtype=jnp.float32)
    out2 = jax.block_until_ready(self_attention_pooling(x2, w1, b1, w2, b2, block_n=8))
    ref2 = _reference(x2, w1, b1, w2, b2)
    assert out2.shape == (N2, H)
    assert jnp.allclose(out2, ref2, atol=1e-5, rtol=1e-5), "mismatch vs reference (tiled grid)"

    print("KERNEL_OK")
</pallas_src>

<mosaic_0001>
module attributes {stable_mosaic.version = 11 : i64} {
  func.func @_sap_kernel(%arg0: i32, %arg1: memref<2x8x32xf32, #tpu.memory_space<vmem>>, %arg2: memref<1x32xf32, #tpu.memory_space<vmem>>, %arg3: memref<2x32xf32, #tpu.memory_space<vmem>>) attributes {dimension_semantics = [#tpu.dimension_semantics<parallel>], iteration_bounds = array<i64: 1>, scalar_prefetch = 0 : i64, scratch_operands = 0 : i64, tpu.core_type = #tpu.core_type<tc>, window_params = [{transform_indices = @transform_0, window_bounds = array<i64: 2, 8, 32>}, {pipeline_mode = #tpu.pipeline_mode<synchronous>, transform_indices = @transform_1, window_bounds = array<i64: 1, 32>}, {transform_indices = @transform_2, window_bounds = array<i64: 2, 32>}]} {
    %c0 = arith.constant 0 : index
    %c0_0 = arith.constant 0 : index
    %c0_1 = arith.constant 0 : index
    %0 = vector.load %arg1[%c0, %c0_0, %c0_1] : memref<2x8x32xf32, #tpu.memory_space<vmem>>, vector<2x8x32xf32>
    %c0_2 = arith.constant 0 : index
    %c0_3 = arith.constant 0 : index
    %1 = vector.load %arg2[%c0_2, %c0_3] : memref<1x32xf32, #tpu.memory_space<vmem>>, vector<1x32xf32>
    %2 = vector.shape_cast %1 : vector<1x32xf32> to vector<1x1x32xf32>
    %3 = vector.broadcast %2 : vector<1x1x32xf32> to vector<2x8x32xf32>
    %4 = arith.mulf %0, %3 : vector<2x8x32xf32>
    %cst = arith.constant dense<0.000000e+00> : vector<2x8xf32>
    %5 = vector.multi_reduction <add>, %4, %cst [2] : vector<2x8x32xf32> to vector<2x8xf32>
    %cst_4 = arith.constant dense<0xFF800000> : vector<2xf32>
    %6 = vector.multi_reduction <maximumf>, %5, %cst_4 [1] : vector<2x8xf32> to vector<2xf32>
    %7 = vector.shape_cast %6 : vector<2xf32> to vector<2x1xf32>
    %8 = vector.broadcast %7 : vector<2x1xf32> to vector<2x8xf32>
    %9 = arith.subf %5, %8 : vector<2x8xf32>
    %10 = math.exp %9 : vector<2x8xf32>
    %cst_5 = arith.constant dense<0.000000e+00> : vector<2xf32>
    %11 = vector.multi_reduction <add>, %10, %cst_5 [1] : vector<2x8xf32> to vector<2xf32>
    %12 = vector.shape_cast %11 : vector<2xf32> to vector<2x1xf32>
    %13 = vector.shape_cast %10 : vector<2x8xf32> to vector<2x8x1xf32>
    %14 = vector.broadcast %13 : vector<2x8x1xf32> to vector<2x8x32xf32>
    %15 = arith.mulf %0, %14 : vector<2x8x32xf32>
    %cst_6 = arith.constant dense<0.000000e+00> : vector<2x32xf32>
    %16 = vector.multi_reduction <add>, %15, %cst_6 [1] : vector<2x8x32xf32> to vector<2x32xf32>
    %17 = tpu.reciprocal %12 : vector<2x1xf32> -> vector<2x1xf32>
    %18 = vector.broadcast %17 : vector<2x1xf32> to vector<2x32xf32>
    %19 = arith.mulf %16, %18 : vector<2x32xf32>
    %c0_7 = arith.constant 0 : index
    %c0_8 = arith.constant 0 : index
    %20 = vector.load %arg3[%c0_7, %c0_8] : memref<2x32xf32, #tpu.memory_space<vmem>>, vector<2x32xf32>
    tpu.vector_store %arg3[%c0_7, %c0_8], %19 {strides = array<i32>} : memref<2x32xf32, #tpu.memory_space<vmem>>, vector<2x32xf32>,
    return
  }
  func.func @transform_0(%arg0: i32) -> (i32, i32, i32) {
    %c0_i32 = arith.constant 0 : i32
    %c0_i32_0 = arith.constant 0 : i32
    %c0_i32_1 = arith.constant 0 : i32
    return %arg0, %c0_i32, %c0_i32_0 : i32, i32, i32
  }
  func.func @transform_1(%arg0: i32) -> (i32, i32) {
    %c0_i32 = arith.constant 0 : i32
    %c0_i32_0 = arith.constant 0 : i32
    %c0_i32_1 = arith.constant 0 : i32
    return %c0_i32, %c0_i32_0 : i32, i32
  }
  func.func @transform_2(%arg0: i32) -> (i32, i32) {
    %c0_i32 = arith.constant 0 : i32
    %c0_i32_0 = arith.constant 0 : i32
    return %arg0, %c0_i32 : i32, i32
  }
}

</mosaic_0001>

<llo_original>
// kernel: tpu_custom_call.1
$region0: #{tpu_custom_call.1}
  #allocation0 [shape = 'u32[]', space=smem, size = 0x4, offset = 0x4, fixed_abs, tag = 'smem constant byte address 0x4 - core index']
  #allocation1 [shape = 'u32[144,128]{1,0:T(1,128)}', space=vmem, size = 0x12000, scoped, tag = 'internal scratch']
  %s0 = inlined_call_operand.hbm [shape: f32[2,8,32], index: 0, kind: input, shape index: {}]
  %s1 = inlined_call_operand.vmem [shape: f32[1,32], index: 1, kind: input, shape index: {}]
  %s2 = inlined_call_operand.hbm [shape: f32[2,32], index: 2, kind: output, shape index: {}]
  %s3 = sld [smem:[#allocation0]]
  $region22: #{tpu_custom_call.1} parent=0
    _
  %s5 = ssub.s32 1, %s3
  %s6 = scalar_select 0, %s5, %s3
  $region1: #{tpu_custom_call.1} parent=0
    #allocation2 [shape = 'u8[8192]{0}', space=vmem, size = 0x2000, scoped, tag = 'input window, operand 0, single buffered']
    #allocation3 [shape = 's32[1]{0}', space=sflag, size = 0x4, scoped, tag = 'scoped memory for tpu_custom_call.1']
    #allocation4 [shape = 's32[1]{0}', space=sflag, size = 0x4, scoped, tag = 'scoped memory for tpu_custom_call.1']
    #allocation5 [shape = 'u8[1024]{0}', space=vmem, size = 0x400, scoped, tag = 'output window, operand 0, single buffered']
    %7 = vsyncpa [#allocation3], 0
    %8 = vsyncpa [#allocation4], 0
    // Predicated region
    $region2: #{tpu_custom_call.1} parent=1 // pred_check
      _
    $region3: #{tpu_custom_call.1} parent=1 // pred_check_branch
      %10 = sbr.rel (0) target = $region5
    $region4: #{tpu_custom_call.1} parent=1 // pred_region
      %s12 = ssub.s32 256, 256
      %13 = vsyncadd [#allocation3], %s12
      %s14 = sshll.u32 [#allocation2], 4
      %s15 = int_to_ptr.vmem [resolvable:$true] %s14
      %20 = dma.hbm_to_vmem [thread:$0]  %s0, 256, %s15, [#allocation3], 128, 128, 8
    $region5: #{tpu_custom_call.1} parent=1 // pred_fallthru
      _
    // Predicated region
    $region6: #{tpu_custom_call.1} parent=1 // pred_check
      _
    $region7: #{tpu_custom_call.1} parent=1 // pred_check_branch
      %22 = sbr.rel (0) target = $region9
    $region8: #{tpu_custom_call.1} parent=1 // pred_region
      _
    $region9: #{tpu_custom_call.1} parent=1 // pred_fallthru
      _
    // Predicated region
    $region10: #{tpu_custom_call.1} parent=1 // pred_check
      _
    $region11: #{tpu_custom_call.1} parent=1 // pred_check_branch
      %24 = sbr.rel (0) target = $region13
    $region12: #{tpu_custom_call.1} parent=1 // pred_region
      %25 = dma.done [#allocation3], 256
    $region13: #{tpu_custom_call.1} parent=1 // pred_fallthru
      _
    %v26 = vld [vmem:[#allocation2] sm:$0xff]
    %v27 = vld [vmem:[#allocation2 + $0x8] sm:$0xff]
    %v28 = vld [vmem:[%s1] sm:$0x1]
    %v30 = vlaneseq
    %v31 = vshrl.u32 %v30, 7
    %v32 = vsub.s32 0, %v31
    %v33 = vrot.slane %v28, %v32
    %v35 = vmul.f32 %v26, %v33
    %v36 = vmul.f32 %v27, %v33
    %vm37 = vcmask 261120
    %v38 = vsel %vm37, %v35, 0.0
    %39 = vadd.xlane.f32.xlu0 %v38
    %v40 = vpop.xlane.xlu0 %39
    %v41 = vsel %vm37, %v36, 0.0
    %42 = vadd.xlane.f32.xlu0 %v41
    %v43 = vpop.xlane.xlu0 %42
    %v46 = vlaneseq
    %v47 = vand.u32 %v46, 127
    %v48 = vlaneseq
    %v49 = vshrl.u32 %v48, 7
    %v50 = vsub.s32 %v47, %v49
    %v51 = vrot.slane %v40, %v50
    %v52 = vlaneseq
    %v53 = vshrl.u32 %v52, 7
    %v54 = vsub.s32 %v47, %v53
    %v55 = vrot.slane %v43, %v54
    %vm56 = vcmask 1041409
    %v57 = vsel %vm56, %v55, %v51
    %vm59 = vcmask 58368
    %v60 = vsel %vm59, %v57, -inf
    %61 = vmax.xlane.f32.xlu0 %v60
    %v62 = vpop.xlane.xlu0 %61
    %v64 = vlaneseq
    %v65 = vshrl.u32 %v64, 7
    %v66 = vsub.s32 0, %v65
    %v67 = vrot.slane %v62, %v66
    %v68 = vlaneseq
    %v69 = vshrl.u32 %v68, 7
    %v70 = vsub.s32 1, %v69
    %v71 = vrot.slane %v62, %v70
    %v74 = vsub.f32 %v40, %v67
    %v75 = vsub.f32 %v43, %v71
    %v76 = vmul.f32 %v74, 1.442695
    %v77 = vpow.pop %v76
    %v78 = vmul.f32 %v75, 1.442695
    %v79 = vpow.pop %v78
    %82 = vset.pattern.permute.xlu0 0
    %83 = vperm.xlu0 %82, %v77
    %v84 = vpop.permute.xlu0 %83
    %85 = vset.pattern.permute.xlu0 0
    %86 = vperm.xlu0 %85, %v79
    %v87 = vpop.permute.xlu0 %86
    %v88 = vlaneseq
    %v89 = vshrl.u32 %v88, 7
    %v90 = vsub.s32 %v47, %v89
    %v91 = vrot.slane %v84, %v90
    %v92 = vlaneseq
    %v93 = vshrl.u32 %v92, 7
    %v94 = vsub.s32 %v47, %v93
    %v95 = vrot.slane %v87, %v94
    %v96 = vsel %vm56, %v95, %v91
    %v98 = vsel %vm59, %v96, 0.0
    %99 = vadd.xlane.f32.xlu0 %v98
    %v100 = vpop.xlane.xlu0 %99
    %v103 = vmul.f32 %v26, %v84
    %v104 = vmul.f32 %v27, %v87
    %v105 = vsel %vm37, %v103, 0.0
    %v106 = vrot.slane %v105, 4
    %v107 = vadd.f32 %v105, %v106
    %v108 = vrot.slane %v107, 2
    %v109 = vadd.f32 %v107, %v108
    %v110 = vrot.slane %v109, 1
    %v111 = vadd.f32 %v109, %v110
    %v112 = vsel %vm37, %v104, 0.0
    %v113 = vrot.slane %v112, 4
    %v114 = vadd.f32 %v112, %v113
    %v115 = vrot.slane %v114, 2
    %v116 = vadd.f32 %v114, %v115
    %v117 = vrot.slane %v116, 1
    %v118 = vadd.f32 %v116, %v117
    %v119 = vrcp.pop %v100
    %v121 = vrot.slane %v119, 1
    %v124 = vmul.f32 %v111, %v119
    %v125 = vmul.f32 %v118, %v121
    %v128 = vrot.slane %v125, 7
    %v129 = vsel %vm56, %v128, %v124
    %vm131 = vcmask 254976
    %132 = vst.msk [vmem:[#allocation5] sm:$0x3] %vm131, %v129
    // Predicated region
    $region14: #{tpu_custom_call.1} parent=1 // pred_check
      _
    $region15: #{tpu_custom_call.1} parent=1 // pred_check_branch
      %134 = sbr.rel (0) target = $region17
    $region16: #{tpu_custom_call.1} parent=1 // pred_region
      %s136 = ssub.s32 32, 32
      %137 = vsyncadd [#allocation4], %s136
      %s139 = sshll.u32 [#allocation5], 4
      %s140 = int_to_ptr.vmem [resolvable:$true] %s139
      %142 = dma.vmem_to_hbm [thread:$0]  %s140, 32, %s2, [#allocation4]
    $region17: #{tpu_custom_call.1} parent=1 // pred_fallthru
      _
    // Predicated region
    $region18: #{tpu_custom_call.1} parent=1 // pred_check
      _
    $region19: #{tpu_custom_call.1} parent=1 // pred_check_branch
      %144 = sbr.rel (0) target = $region21
    $region20: #{tpu_custom_call.1} parent=1 // pred_region
      %145 = dma.done [#allocation4], 32
    $region21: #{tpu_custom_call.1} parent=1 // pred_fallthru
      _
    %146 = vsyncpa [#allocation3], 1
    %147 = vsyncpa [#allocation4], 1

</llo_original>
